<compile_context>
chip_gen: v5e
topology: v5e:2x2
jax: 0.10.0
libtpu: 0.0.40
codegen_flags: <defaults>
</compile_context>

<pallas_src>
import numpy as np
import jax
import jax.numpy as jnp
from jax.experimental import pallas as pl
from jax.experimental.pallas import tpu as pltpu

C_OUT = 4
KH = KW = 3
LANE = 128          # lane-tile width; also used as the flat pad (keeps scratch stores aligned)


def conv_autoencoder_forward(x, w_enc, b_enc, w_dec_t, b_dec):
    """x: (B,1,H,W) f32; w_enc: (C,1,3,3); b_enc: (C,);
       w_dec_t: (C,1,3,3)  ConvTranspose2d weight laid out (in,out,kh,kw); b_dec: (1,)."""
    B, _, H, W = x.shape
    C = w_enc.shape[0]
    HW = H * W
    PAD = LANE                      # must be >= W+1 for the flat vertical zero-pad trick
    assert PAD >= W + 1, "image width too large for LANE-sized flat padding"
    HWP = HW + 2 * PAD

    # batch blocking: pack up to 8 images (sublanes) into one grid step
    TB = B if B < 8 else 8
    Bp = ((B + TB - 1) // TB) * TB

    # ---- wrapper-side layout plumbing (flatten, pad, flip, reorder) ----
    xf = x.astype(jnp.float32).reshape(B, HW)
    xf = jnp.pad(xf, ((0, Bp - B), (PAD, PAD)))                               # (Bp, HWP)

    we = jnp.transpose(w_enc.astype(jnp.float32).reshape(C, 9), (1, 0)).reshape(9, C, 1)
    # ConvTranspose2d(stride=1, padding=1) == correlation with the spatially flipped kernel
    wd_flip = jnp.flip(w_dec_t.astype(jnp.float32)[:, 0], axis=(-2, -1))      # (C,3,3)
    wd = jnp.transpose(wd_flip.reshape(C, 9), (1, 0)).reshape(9, C, 1)
    be = b_enc.astype(jnp.float32).reshape(C, 1)
    bd = b_dec.astype(jnp.float32).reshape(1)

    # column masks: left taps (v=0) are invalid at j==0, right taps (v=2) at j==W-1
    col = jnp.arange(HW, dtype=jnp.int32) % W
    ml = (col != 0).astype(jnp.float32).reshape(1, HW)
    mr = (col != W - 1).astype(jnp.float32).reshape(1, HW)

    def kernel(x_ref, we_ref, be_ref, wd_ref, bd_ref, ml_ref, mr_ref, out_ref, f_ref):
        # x_ref : (TB, HWP)   flat, zero-padded images          (VMEM)
        # we_ref: (9, C, 1)   encoder tap weights               (VMEM)
        # be_ref: (C, 1)      encoder bias                      (VMEM)
        # wd_ref: (9, C, 1)   flipped transposed-conv weights   (VMEM)
        # bd_ref: (1,)        decoder bias                      (SMEM)
        # ml_ref/mr_ref: (1, HW) column masks                   (VMEM)
        # out_ref: (TB, HW)   lane-dense output
        # f_ref : (TB, C, HWP) scratch, padded encoder features
        mlv = ml_ref[...]
        mrv = mr_ref[...]
        wev = we_ref[...]
        wdv = wd_ref[...]

        # hoisted, masked tap views of the flat padded input; shared by all C channels
        taps = []
        for u in range(KH):
            for v in range(KW):
                off = PAD + (u - 1) * W + (v - 1)
                xt = x_ref[:, off:off + HW]                    # (TB, HW)
                if v == 0:
                    xt = xt * mlv
                elif v == 2:
                    xt = xt * mrv
                taps.append(xt)

        # --- encoder: channel-vectorized 3x3 conv + bias + ReLU -> (TB, C, HW) ---
        acc = jnp.broadcast_to(be_ref[...][None, :, :], (TB, C, HW))
        for t in range(9):
            acc = acc + taps[t][:, None, :] * wev[t][None, :, :]
        feat = jnp.maximum(acc, 0.0)

        # padded feature scratch: three lane-aligned stores, no element written twice
        f_ref[:, :, 0:PAD] = jnp.zeros((TB, C, PAD), jnp.float32)
        f_ref[:, :, PAD + HW:HWP] = jnp.zeros((TB, C, PAD), jnp.float32)
        f_ref[:, :, PAD:PAD + HW] = feat

        # --- decoder: correlation with flipped kernel over padded features + Sigmoid ---
        acc2 = jnp.zeros((TB, C, HW), jnp.float32)
        for u in range(KH):
            for v in range(KW):
                t = u * 3 + v
                off = PAD + (u - 1) * W + (v - 1)
                term = f_ref[:, :, off:off + HW] * wdv[t][None, :, :]   # (TB, C, HW)
                if v == 0:
                    term = term * mlv[:, None, :]
                elif v == 2:
                    term = term * mrv[:, None, :]
                acc2 = acc2 + term
        y = jnp.sum(acc2, axis=1) + bd_ref[0]                           # (TB, HW)
        out_ref[...] = jax.nn.sigmoid(y)

    smem = pl.BlockSpec(memory_space=pltpu.MemorySpace.SMEM)
    out = pl.pallas_call(
        kernel,
        out_shape=jax.ShapeDtypeStruct((Bp, HW), jnp.float32),
        grid=(Bp // TB,),
        in_specs=[
            pl.BlockSpec((TB, HWP), lambda b: (b, 0)),
            pl.BlockSpec((9, C, 1), lambda b: (0, 0, 0)),
            pl.BlockSpec((C, 1), lambda b: (0, 0)),
            pl.BlockSpec((9, C, 1), lambda b: (0, 0, 0)),
            smem,
            pl.BlockSpec((1, HW), lambda b: (0, 0)),
            pl.BlockSpec((1, HW), lambda b: (0, 0)),
        ],
        out_specs=pl.BlockSpec((TB, HW), lambda b: (b, 0)),
        scratch_shapes=[pltpu.VMEM((TB, C, HWP), jnp.float32)],
        compiler_params=pltpu.CompilerParams(dimension_semantics=("parallel",)),
    )(xf, we, be, wd, bd, ml, mr)

    return out[:B].reshape(B, 1, H, W)


if __name__ == "__main__":
    key = jax.random.PRNGKey(0)
    k1, k2, k3, k4, k5 = jax.random.split(key, 5)
    B, H, W, C = 2, 16, 16, C_OUT

    x = jax.random.uniform(k1, (B, 1, H, W), dtype=jnp.float32)
    bound_e = 1.0 / np.sqrt(1 * KH * KW)
    w_enc = jax.random.uniform(k2, (C, 1, KH, KW), minval=-bound_e, maxval=bound_e,
                               dtype=jnp.float32)
    b_enc = jax.random.uniform(k3, (C,), minval=-bound_e, maxval=bound_e,
                               dtype=jnp.float32)
    bound_d = 1.0 / np.sqrt(C * KH * KW)
    w_dec = jax.random.uniform(k4, (C, 1, KH, KW), minval=-bound_d, maxval=bound_d,
                               dtype=jnp.float32)
    b_dec = jax.random.uniform(k5, (1,), minval=-bound_d, maxval=bound_d,
                               dtype=jnp.float32)

    out = conv_autoencoder_forward(x, w_enc, b_enc, w_dec, b_dec)
    out = jax.block_until_ready(out)

    # --- pure-numpy reference with exact PyTorch semantics ---
    xn, wen, ben = np.asarray(x), np.asarray(w_enc), np.asarray(b_enc)
    wdn, bdn = np.asarray(w_dec), np.asarray(b_dec)
    xp = np.pad(xn, ((0, 0), (0, 0), (1, 1), (1, 1)))
    feat = np.zeros((B, C, H, W), np.float32)
    for c in range(C):
        acc = np.zeros((B, H, W), np.float32)
        for u in range(KH):
            for v in range(KW):
                acc += xp[:, 0, u:u + H, v:v + W] * wen[c, 0, u, v]
        feat[:, c] = np.maximum(acc + ben[c], 0.0)
    # transposed conv via its scatter definition, then crop padding=1
    y_full = np.zeros((B, 1, H + 2, W + 2), np.float32)
    for c in range(C):
        for u in range(KH):
            for v in range(KW):
                y_full[:, 0, u:u + H, v:v + W] += feat[:, c] * wdn[c, 0, u, v]
    y = y_full[:, :, 1:1 + H, 1:1 + W] + bdn[0]
    ref = 1.0 / (1.0 + np.exp(-y))

    assert np.allclose(np.asarray(out), ref, atol=1e-5), "mismatch vs reference"
    print("KERNEL_OK")
</pallas_src>

<mosaic_0001>
module attributes {stable_mosaic.version = 11 : i64} {
  func.func @kernel(%arg0: i32, %arg1: memref<2x512xf32, #tpu.memory_space<vmem>>, %arg2: memref<9x4x1xf32, #tpu.memory_space<vmem>>, %arg3: memref<4x1xf32, #tpu.memory_space<vmem>>, %arg4: memref<9x4x1xf32, #tpu.memory_space<vmem>>, %arg5: memref<1xf32, #tpu.memory_space<smem>>, %arg6: memref<1x256xf32, #tpu.memory_space<vmem>>, %arg7: memref<1x256xf32, #tpu.memory_space<vmem>>, %arg8: memref<2x256xf32, #tpu.memory_space<vmem>>, %arg9: memref<2x4x512xf32, #tpu.memory_space<vmem>>) attributes {dimension_semantics = [#tpu.dimension_semantics<parallel>], iteration_bounds = array<i64: 1>, scalar_prefetch = 0 : i64, scratch_operands = 1 : i64, tpu.core_type = #tpu.core_type<tc>, window_params = [{transform_indices = @transform_0, window_bounds = array<i64: 2, 512>}, {pipeline_mode = #tpu.pipeline_mode<synchronous>, transform_indices = @transform_1, window_bounds = array<i64: 9, 4, 1>}, {pipeline_mode = #tpu.pipeline_mode<synchronous>, transform_indices = @transform_2, window_bounds = array<i64: 4, 1>}, {pipeline_mode = #tpu.pipeline_mode<synchronous>, transform_indices = @transform_3, window_bounds = array<i64: 9, 4, 1>}, {transform_indices = @transform_4, window_bounds = array<i64: 1>}, {pipeline_mode = #tpu.pipeline_mode<synchronous>, transform_indices = @transform_5, window_bounds = array<i64: 1, 256>}, {pipeline_mode = #tpu.pipeline_mode<synchronous>, transform_indices = @transform_6, window_bounds = array<i64: 1, 256>}, {transform_indices = @transform_7, window_bounds = array<i64: 2, 256>}]} {
    %c0 = arith.constant 0 : index
    %c0_0 = arith.constant 0 : index
    %0 = vector.load %arg6[%c0, %c0_0] : memref<1x256xf32, #tpu.memory_space<vmem>>, vector<1x256xf32>
    %c0_1 = arith.constant 0 : index
    %c0_2 = arith.constant 0 : index
    %1 = vector.load %arg7[%c0_1, %c0_2] : memref<1x256xf32, #tpu.memory_space<vmem>>, vector<1x256xf32>
    %c0_3 = arith.constant 0 : index
    %c0_4 = arith.constant 0 : index
    %c0_5 = arith.constant 0 : index
    %2 = vector.load %arg2[%c0_3, %c0_4, %c0_5] : memref<9x4x1xf32, #tpu.memory_space<vmem>>, vector<9x4x1xf32>
    %c0_6 = arith.constant 0 : index
    %c0_7 = arith.constant 0 : index
    %c0_8 = arith.constant 0 : index
    %3 = vector.load %arg4[%c0_6, %c0_7, %c0_8] : memref<9x4x1xf32, #tpu.memory_space<vmem>>, vector<9x4x1xf32>
    %c0_9 = arith.constant 0 : index
    %c111 = arith.constant 111 : index
    %4 = vector.load %arg1[%c0_9, %c111] : memref<2x512xf32, #tpu.memory_space<vmem>>, vector<2x256xf32>
    %5 = vector.broadcast %0 : vector<1x256xf32> to vector<2x256xf32>
    %6 = arith.mulf %4, %5 : vector<2x256xf32>
    %c0_10 = arith.constant 0 : index
    %c112 = arith.constant 112 : index
    %7 = vector.load %arg1[%c0_10, %c112] : memref<2x512xf32, #tpu.memory_space<vmem>>, vector<2x256xf32>
    %c0_11 = arith.constant 0 : index
    %c113 = arith.constant 113 : index
    %8 = vector.load %arg1[%c0_11, %c113] : memref<2x512xf32, #tpu.memory_space<vmem>>, vector<2x256xf32>
    %9 = vector.broadcast %1 : vector<1x256xf32> to vector<2x256xf32>
    %10 = arith.mulf %8, %9 : vector<2x256xf32>
    %c0_12 = arith.constant 0 : index
    %c127 = arith.constant 127 : index
    %11 = vector.load %arg1[%c0_12, %c127] : memref<2x512xf32, #tpu.memory_space<vmem>>, vector<2x256xf32>
    %12 = vector.broadcast %0 : vector<1x256xf32> to vector<2x256xf32>
    %13 = arith.mulf %11, %12 : vector<2x256xf32>
    %c0_13 = arith.constant 0 : index
    %c128 = arith.constant 128 : index
    %14 = vector.load %arg1[%c0_13, %c128] : memref<2x512xf32, #tpu.memory_space<vmem>>, vector<2x256xf32>
    %c0_14 = arith.constant 0 : index
    %c129 = arith.constant 129 : index
    %15 = vector.load %arg1[%c0_14, %c129] : memref<2x512xf32, #tpu.memory_space<vmem>>, vector<2x256xf32>
    %16 = vector.broadcast %1 : vector<1x256xf32> to vector<2x256xf32>
    %17 = arith.mulf %15, %16 : vector<2x256xf32>
    %c0_15 = arith.constant 0 : index
    %c143 = arith.constant 143 : index
    %18 = vector.load %arg1[%c0_15, %c143] : memref<2x512xf32, #tpu.memory_space<vmem>>, vector<2x256xf32>
    %19 = vector.broadcast %0 : vector<1x256xf32> to vector<2x256xf32>
    %20 = arith.mulf %18, %19 : vector<2x256xf32>
    %c0_16 = arith.constant 0 : index
    %c144 = arith.constant 144 : index
    %21 = vector.load %arg1[%c0_16, %c144] : memref<2x512xf32, #tpu.memory_space<vmem>>, vector<2x256xf32>
    %c0_17 = arith.constant 0 : index
    %c145 = arith.constant 145 : index
    %22 = vector.load %arg1[%c0_17, %c145] : memref<2x512xf32, #tpu.memory_space<vmem>>, vector<2x256xf32>
    %23 = vector.broadcast %1 : vector<1x256xf32> to vector<2x256xf32>
    %24 = arith.mulf %22, %23 : vector<2x256xf32>
    %c0_18 = arith.constant 0 : index
    %c0_19 = arith.constant 0 : index
    %25 = vector.load %arg3[%c0_18, %c0_19] : memref<4x1xf32, #tpu.memory_space<vmem>>, vector<4x1xf32>
    %26 = vector.shape_cast %25 : vector<4x1xf32> to vector<1x4x1xf32>
    %27 = vector.shape_cast %26 : vector<1x4x1xf32> to vector<1x4x1xf32>
    %28 = vector.broadcast %27 : vector<1x4x1xf32> to vector<2x4x256xf32>
    %29 = vector.shape_cast %6 : vector<2x256xf32> to vector<2x1x256xf32>
    %30 = vector.extract_strided_slice %2 {offsets = [0, 0, 0], sizes = [1, 4, 1], strides = [1, 1, 1]} : vector<9x4x1xf32> to vector<1x4x1xf32>
    %31 = vector.shape_cast %30 : vector<1x4x1xf32> to vector<4x1xf32>
    %32 = vector.shape_cast %31 : vector<4x1xf32> to vector<1x4x1xf32>
    %33 = vector.broadcast %29 : vector<2x1x256xf32> to vector<2x4x256xf32>
    %34 = vector.broadcast %32 : vector<1x4x1xf32> to vector<2x4x256xf32>
    %35 = arith.mulf %33, %34 : vector<2x4x256xf32>
    %36 = arith.addf %28, %35 : vector<2x4x256xf32>
    %37 = vector.shape_cast %7 : vector<2x256xf32> to vector<2x1x256xf32>
    %38 = vector.extract_strided_slice %2 {offsets = [1, 0, 0], sizes = [1, 4, 1], strides = [1, 1, 1]} : vector<9x4x1xf32> to vector<1x4x1xf32>
    %39 = vector.shape_cast %38 : vector<1x4x1xf32> to vector<4x1xf32>
    %40 = vector.shape_cast %39 : vector<4x1xf32> to vector<1x4x1xf32>
    %41 = vector.broadcast %37 : vector<2x1x256xf32> to vector<2x4x256xf32>
    %42 = vector.broadcast %40 : vector<1x4x1xf32> to vector<2x4x256xf32>
    %43 = arith.mulf %41, %42 : vector<2x4x256xf32>
    %44 = arith.addf %36, %43 : vector<2x4x256xf32>
    %45 = vector.shape_cast %10 : vector<2x256xf32> to vector<2x1x256xf32>
    %46 = vector.extract_strided_slice %2 {offsets = [2, 0, 0], sizes = [1, 4, 1], strides = [1, 1, 1]} : vector<9x4x1xf32> to vector<1x4x1xf32>
    %47 = vector.shape_cast %46 : vector<1x4x1xf32> to vector<4x1xf32>
    %48 = vector.shape_cast %47 : vector<4x1xf32> to vector<1x4x1xf32>
    %49 = vector.broadcast %45 : vector<2x1x256xf32> to vector<2x4x256xf32>
    %50 = vector.broadcast %48 : vector<1x4x1xf32> to vector<2x4x256xf32>
    %51 = arith.mulf %49, %50 : vector<2x4x256xf32>
    %52 = arith.addf %44, %51 : vector<2x4x256xf32>
    %53 = vector.shape_cast %13 : vector<2x256xf32> to vector<2x1x256xf32>
    %54 = vector.extract_strided_slice %2 {offsets = [3, 0, 0], sizes = [1, 4, 1], strides = [1, 1, 1]} : vector<9x4x1xf32> to vector<1x4x1xf32>
    %55 = vector.shape_cast %54 : vector<1x4x1xf32> to vector<4x1xf32>
    %56 = vector.shape_cast %55 : vector<4x1xf32> to vector<1x4x1xf32>
    %57 = vector.broadcast %53 : vector<2x1x256xf32> to vector<2x4x256xf32>
    %58 = vector.broadcast %56 : vector<1x4x1xf32> to vector<2x4x256xf32>
    %59 = arith.mulf %57, %58 : vector<2x4x256xf32>
    %60 = arith.addf %52, %59 : vector<2x4x256xf32>
    %61 = vector.shape_cast %14 : vector<2x256xf32> to vector<2x1x256xf32>
    %62 = vector.extract_strided_slice %2 {offsets = [4, 0, 0], sizes = [1, 4, 1], strides = [1, 1, 1]} : vector<9x4x1xf32> to vector<1x4x1xf32>
    %63 = vector.shape_cast %62 : vector<1x4x1xf32> to vector<4x1xf32>
    %64 = vector.shape_cast %63 : vector<4x1xf32> to vector<1x4x1xf32>
    %65 = vector.broadcast %61 : vector<2x1x256xf32> to vector<2x4x256xf32>
    %66 = vector.broadcast %64 : vector<1x4x1xf32> to vector<2x4x256xf32>
    %67 = arith.mulf %65, %66 : vector<2x4x256xf32>
    %68 = arith.addf %60, %67 : vector<2x4x256xf32>
    %69 = vector.shape_cast %17 : vector<2x256xf32> to vector<2x1x256xf32>
    %70 = vector.extract_strided_slice %2 {offsets = [5, 0, 0], sizes = [1, 4, 1], strides = [1, 1, 1]} : vector<9x4x1xf32> to vector<1x4x1xf32>
    %71 = vector.shape_cast %70 : vector<1x4x1xf32> to vector<4x1xf32>
    %72 = vector.shape_cast %71 : vector<4x1xf32> to vector<1x4x1xf32>
    %73 = vector.broadcast %69 : vector<2x1x256xf32> to vector<2x4x256xf32>
    %74 = vector.broadcast %72 : vector<1x4x1xf32> to vector<2x4x256xf32>
    %75 = arith.mulf %73, %74 : vector<2x4x256xf32>
    %76 = arith.addf %68, %75 : vector<2x4x256xf32>
    %77 = vector.shape_cast %20 : vector<2x256xf32> to vector<2x1x256xf32>
    %78 = vector.extract_strided_slice %2 {offsets = [6, 0, 0], sizes = [1, 4, 1], strides = [1, 1, 1]} : vector<9x4x1xf32> to vector<1x4x1xf32>
    %79 = vector.shape_cast %78 : vector<1x4x1xf32> to vector<4x1xf32>
    %80 = vector.shape_cast %79 : vector<4x1xf32> to vector<1x4x1xf32>
    %81 = vector.broadcast %77 : vector<2x1x256xf32> to vector<2x4x256xf32>
    %82 = vector.broadcast %80 : vector<1x4x1xf32> to vector<2x4x256xf32>
    %83 = arith.mulf %81, %82 : vector<2x4x256xf32>
    %84 = arith.addf %76, %83 : vector<2x4x256xf32>
    %85 = vector.shape_cast %21 : vector<2x256xf32> to vector<2x1x256xf32>
    %86 = vector.extract_strided_slice %2 {offsets = [7, 0, 0], sizes = [1, 4, 1], strides = [1, 1, 1]} : vector<9x4x1xf32> to vector<1x4x1xf32>
    %87 = vector.shape_cast %86 : vector<1x4x1xf32> to vector<4x1xf32>
    %88 = vector.shape_cast %87 : vector<4x1xf32> to vector<1x4x1xf32>
    %89 = vector.broadcast %85 : vector<2x1x256xf32> to vector<2x4x256xf32>
    %90 = vector.broadcast %88 : vector<1x4x1xf32> to vector<2x4x256xf32>
    %91 = arith.mulf %89, %90 : vector<2x4x256xf32>
    %92 = arith.addf %84, %91 : vector<2x4x256xf32>
    %93 = vector.shape_cast %24 : vector<2x256xf32> to vector<2x1x256xf32>
    %94 = vector.extract_strided_slice %2 {offsets = [8, 0, 0], sizes = [1, 4, 1], strides = [1, 1, 1]} : vector<9x4x1xf32> to vector<1x4x1xf32>
    %95 = vector.shape_cast %94 : vector<1x4x1xf32> to vector<4x1xf32>
    %96 = vector.shape_cast %95 : vector<4x1xf32> to vector<1x4x1xf32>
    %97 = vector.broadcast %93 : vector<2x1x256xf32> to vector<2x4x256xf32>
    %98 = vector.broadcast %96 : vector<1x4x1xf32> to vector<2x4x256xf32>
    %99 = arith.mulf %97, %98 : vector<2x4x256xf32>
    %100 = arith.addf %92, %99 : vector<2x4x256xf32>
    %cst = arith.constant 0.000000e+00 : f32
    %101 = vector.broadcast %cst : f32 to vector<2x4x256xf32>
    %102 = arith.maximumf %100, %101 : vector<2x4x256xf32>
    %cst_20 = arith.constant 0.000000e+00 : f32
    %103 = vector.broadcast %cst_20 : f32 to vector<2x4x128xf32>
    %c0_21 = arith.constant 0 : index
    %c0_22 = arith.constant 0 : index
    %c0_23 = arith.constant 0 : index
    %104 = vector.load %arg9[%c0_21, %c0_22, %c0_23] : memref<2x4x512xf32, #tpu.memory_space<vmem>>, vector<2x4x128xf32>
    tpu.vector_store %arg9[%c0_21, %c0_22, %c0_23], %103 {strides = array<i32>} : memref<2x4x512xf32, #tpu.memory_space<vmem>>, vector<2x4x128xf32>,
    %cst_24 = arith.constant 0.000000e+00 : f32
    %105 = vector.broadcast %cst_24 : f32 to vector<2x4x128xf32>
    %c0_25 = arith.constant 0 : index
    %c0_26 = arith.constant 0 : index
    %c384 = arith.constant 384 : index
    %106 = vector.load %arg9[%c0_25, %c0_26, %c384] : memref<2x4x512xf32, #tpu.memory_space<vmem>>, vector<2x4x128xf32>
    tpu.vector_store %arg9[%c0_25, %c0_26, %c384], %105 {strides = array<i32>} : memref<2x4x512xf32, #tpu.memory_space<vmem>>, vector<2x4x128xf32>,
    %c0_27 = arith.constant 0 : index
    %c0_28 = arith.constant 0 : index
    %c128_29 = arith.constant 128 : index
    %107 = vector.load %arg9[%c0_27, %c0_28, %c128_29] : memref<2x4x512xf32, #tpu.memory_space<vmem>>, vector<2x4x256xf32>
    tpu.vector_store %arg9[%c0_27, %c0_28, %c128_29], %102 {strides = array<i32>} : memref<2x4x512xf32, #tpu.memory_space<vmem>>, vector<2x4x256xf32>,
    %cst_30 = arith.constant 0.000000e+00 : f32
    %108 = vector.broadcast %cst_30 : f32 to vector<2x4x256xf32>
    %c0_31 = arith.constant 0 : index
    %c0_32 = arith.constant 0 : index
    %c111_33 = arith.constant 111 : index
    %109 = vector.load %arg9[%c0_31, %c0_32, %c111_33] : memref<2x4x512xf32, #tpu.memory_space<vmem>>, vector<2x4x256xf32>
    %110 = vector.extract_strided_slice %3 {offsets = [0, 0, 0], sizes = [1, 4, 1], strides = [1, 1, 1]} : vector<9x4x1xf32> to vector<1x4x1xf32>
    %111 = vector.shape_cast %110 : vector<1x4x1xf32> to vector<4x1xf32>
    %112 = vector.shape_cast %111 : vector<4x1xf32> to vector<1x4x1xf32>
    %113 = vector.broadcast %112 : vector<1x4x1xf32> to vector<2x4x256xf32>
    %114 = arith.mulf %109, %113 : vector<2x4x256xf32>
    %115 = vector.shape_cast %0 : vector<1x256xf32> to vector<1x1x256xf32>
    %116 = vector.broadcast %115 : vector<1x1x256xf32> to vector<2x4x256xf32>
    %117 = arith.mulf %114, %116 : vector<2x4x256xf32>
    %118 = arith.addf %108, %117 : vector<2x4x256xf32>
    %c0_34 = arith.constant 0 : index
    %c0_35 = arith.constant 0 : index
    %c112_36 = arith.constant 112 : index
    %119 = vector.load %arg9[%c0_34, %c0_35, %c112_36] : memref<2x4x512xf32, #tpu.memory_space<vmem>>, vector<2x4x256xf32>
    %120 = vector.extract_strided_slice %3 {offsets = [1, 0, 0], sizes = [1, 4, 1], strides = [1, 1, 1]} : vector<9x4x1xf32> to vector<1x4x1xf32>
    %121 = vector.shape_cast %120 : vector<1x4x1xf32> to vector<4x1xf32>
    %122 = vector.shape_cast %121 : vector<4x1xf32> to vector<1x4x1xf32>
    %123 = vector.broadcast %122 : vector<1x4x1xf32> to vector<2x4x256xf32>
    %124 = arith.mulf %119, %123 : vector<2x4x256xf32>
    %125 = arith.addf %118, %124 : vector<2x4x256xf32>
    %c0_37 = arith.constant 0 : index
    %c0_38 = arith.constant 0 : index
    %c113_39 = arith.constant 113 : index
    %126 = vector.load %arg9[%c0_37, %c0_38, %c113_39] : memref<2x4x512xf32, #tpu.memory_space<vmem>>, vector<2x4x256xf32>
    %127 = vector.extract_strided_slice %3 {offsets = [2, 0, 0], sizes = [1, 4, 1], strides = [1, 1, 1]} : vector<9x4x1xf32> to vector<1x4x1xf32>
    %128 = vector.shape_cast %127 : vector<1x4x1xf32> to vector<4x1xf32>
    %129 = vector.shape_cast %128 : vector<4x1xf32> to vector<1x4x1xf32>
    %130 = vector.broadcast %129 : vector<1x4x1xf32> to vector<2x4x256xf32>
    %131 = arith.mulf %126, %130 : vector<2x4x256xf32>
    %132 = vector.shape_cast %1 : vector<1x256xf32> to vector<1x1x256xf32>
    %133 = vector.broadcast %132 : vector<1x1x256xf32> to vector<2x4x256xf32>
    %134 = arith.mulf %131, %133 : vector<2x4x256xf32>
    %135 = arith.addf %125, %134 : vector<2x4x256xf32>
    %c0_40 = arith.constant 0 : index
    %c0_41 = arith.constant 0 : index
    %c127_42 = arith.constant 127 : index
    %136 = vector.load %arg9[%c0_40, %c0_41, %c127_42] : memref<2x4x512xf32, #tpu.memory_space<vmem>>, vector<2x4x256xf32>
    %137 = vector.extract_strided_slice %3 {offsets = [3, 0, 0], sizes = [1, 4, 1], strides = [1, 1, 1]} : vector<9x4x1xf32> to vector<1x4x1xf32>
    %138 = vector.shape_cast %137 : vector<1x4x1xf32> to vector<4x1xf32>
    %139 = vector.shape_cast %138 : vector<4x1xf32> to vector<1x4x1xf32>
    %140 = vector.broadcast %139 : vector<1x4x1xf32> to vector<2x4x256xf32>
    %141 = arith.mulf %136, %140 : vector<2x4x256xf32>
    %142 = vector.shape_cast %0 : vector<1x256xf32> to vector<1x1x256xf32>
    %143 = vector.broadcast %142 : vector<1x1x256xf32> to vector<2x4x256xf32>
    %144 = arith.mulf %141, %143 : vector<2x4x256xf32>
    %145 = arith.addf %135, %144 : vector<2x4x256xf32>
    %c0_43 = arith.constant 0 : index
    %c0_44 = arith.constant 0 : index
    %c128_45 = arith.constant 128 : index
    %146 = vector.load %arg9[%c0_43, %c0_44, %c128_45] : memref<2x4x512xf32, #tpu.memory_space<vmem>>, vector<2x4x256xf32>
    %147 = vector.extract_strided_slice %3 {offsets = [4, 0, 0], sizes = [1, 4, 1], strides = [1, 1, 1]} : vector<9x4x1xf32> to vector<1x4x1xf32>
    %148 = vector.shape_cast %147 : vector<1x4x1xf32> to vector<4x1xf32>
    %149 = vector.shape_cast %148 : vector<4x1xf32> to vector<1x4x1xf32>
    %150 = vector.broadcast %149 : vector<1x4x1xf32> to vector<2x4x256xf32>
    %151 = arith.mulf %146, %150 : vector<2x4x256xf32>
    %152 = arith.addf %145, %151 : vector<2x4x256xf32>
    %c0_46 = arith.constant 0 : index
    %c0_47 = arith.constant 0 : index
    %c129_48 = arith.constant 129 : index
    %153 = vector.load %arg9[%c0_46, %c0_47, %c129_48] : memref<2x4x512xf32, #tpu.memory_space<vmem>>, vector<2x4x256xf32>
    %154 = vector.extract_strided_slice %3 {offsets = [5, 0, 0], sizes = [1, 4, 1], strides = [1, 1, 1]} : vector<9x4x1xf32> to vector<1x4x1xf32>
    %155 = vector.shape_cast %154 : vector<1x4x1xf32> to vector<4x1xf32>
    %156 = vector.shape_cast %155 : vector<4x1xf32> to vector<1x4x1xf32>
    %157 = vector.broadcast %156 : vector<1x4x1xf32> to vector<2x4x256xf32>
    %158 = arith.mulf %153, %157 : vector<2x4x256xf32>
    %159 = vector.shape_cast %1 : vector<1x256xf32> to vector<1x1x256xf32>
    %160 = vector.broadcast %159 : vector<1x1x256xf32> to vector<2x4x256xf32>
    %161 = arith.mulf %158, %160 : vector<2x4x256xf32>
    %162 = arith.addf %152, %161 : vector<2x4x256xf32>
    %c0_49 = arith.constant 0 : index
    %c0_50 = arith.constant 0 : index
    %c143_51 = arith.constant 143 : index
    %163 = vector.load %arg9[%c0_49, %c0_50, %c143_51] : memref<2x4x512xf32, #tpu.memory_space<vmem>>, vector<2x4x256xf32>
    %164 = vector.extract_strided_slice %3 {offsets = [6, 0, 0], sizes = [1, 4, 1], strides = [1, 1, 1]} : vector<9x4x1xf32> to vector<1x4x1xf32>
    %165 = vector.shape_cast %164 : vector<1x4x1xf32> to vector<4x1xf32>
    %166 = vector.shape_cast %165 : vector<4x1xf32> to vector<1x4x1xf32>
    %167 = vector.broadcast %166 : vector<1x4x1xf32> to vector<2x4x256xf32>
    %168 = arith.mulf %163, %167 : vector<2x4x256xf32>
    %169 = vector.shape_cast %0 : vector<1x256xf32> to vector<1x1x256xf32>
    %170 = vector.broadcast %169 : vector<1x1x256xf32> to vector<2x4x256xf32>
    %171 = arith.mulf %168, %170 : vector<2x4x256xf32>
    %172 = arith.addf %162, %171 : vector<2x4x256xf32>
    %c0_52 = arith.constant 0 : index
    %c0_53 = arith.constant 0 : index
    %c144_54 = arith.constant 144 : index
    %173 = vector.load %arg9[%c0_52, %c0_53, %c144_54] : memref<2x4x512xf32, #tpu.memory_space<vmem>>, vector<2x4x256xf32>
    %174 = vector.extract_strided_slice %3 {offsets = [7, 0, 0], sizes = [1, 4, 1], strides = [1, 1, 1]} : vector<9x4x1xf32> to vector<1x4x1xf32>
    %175 = vector.shape_cast %174 : vector<1x4x1xf32> to vector<4x1xf32>
    %176 = vector.shape_cast %175 : vector<4x1xf32> to vector<1x4x1xf32>
    %177 = vector.broadcast %176 : vector<1x4x1xf32> to vector<2x4x256xf32>
    %178 = arith.mulf %173, %177 : vector<2x4x256xf32>
    %179 = arith.addf %172, %178 : vector<2x4x256xf32>
    %c0_55 = arith.constant 0 : index
    %c0_56 = arith.constant 0 : index
    %c145_57 = arith.constant 145 : index
    %180 = vector.load %arg9[%c0_55, %c0_56, %c145_57] : memref<2x4x512xf32, #tpu.memory_space<vmem>>, vector<2x4x256xf32>
    %181 = vector.extract_strided_slice %3 {offsets = [8, 0, 0], sizes = [1, 4, 1], strides = [1, 1, 1]} : vector<9x4x1xf32> to vector<1x4x1xf32>
    %182 = vector.shape_cast %181 : vector<1x4x1xf32> to vector<4x1xf32>
    %183 = vector.shape_cast %182 : vector<4x1xf32> to vector<1x4x1xf32>
    %184 = vector.broadcast %183 : vector<1x4x1xf32> to vector<2x4x256xf32>
    %185 = arith.mulf %180, %184 : vector<2x4x256xf32>
    %186 = vector.shape_cast %1 : vector<1x256xf32> to vector<1x1x256xf32>
    %187 = vector.broadcast %186 : vector<1x1x256xf32> to vector<2x4x256xf32>
    %188 = arith.mulf %185, %187 : vector<2x4x256xf32>
    %189 = arith.addf %179, %188 : vector<2x4x256xf32>
    %cst_58 = arith.constant dense<0.000000e+00> : vector<2x256xf32>
    %190 = vector.multi_reduction <add>, %189, %cst_58 [1] : vector<2x4x256xf32> to vector<2x256xf32>
    %c0_59 = arith.constant 0 : index
    %191 = memref.load %arg5[%c0_59] : memref<1xf32, #tpu.memory_space<smem>>
    %192 = vector.broadcast %191 : f32 to vector<2x256xf32>
    %193 = arith.addf %190, %192 : vector<2x256xf32>
    %194 = arith.negf %193 : vector<2x256xf32>
    %195 = math.exp %194 : vector<2x256xf32>
    %cst_60 = arith.constant 1.000000e+00 : f32
    %196 = vector.broadcast %cst_60 : f32 to vector<2x256xf32>
    %197 = arith.addf %196, %195 : vector<2x256xf32>
    %198 = arith.divf %196, %197 : vector<2x256xf32>
    %c0_61 = arith.constant 0 : index
    %c0_62 = arith.constant 0 : index
    %199 = vector.load %arg8[%c0_61, %c0_62] : memref<2x256xf32, #tpu.memory_space<vmem>>, vector<2x256xf32>
    tpu.vector_store %arg8[%c0_61, %c0_62], %198 {strides = array<i32>} : memref<2x256xf32, #tpu.memory_space<vmem>>, vector<2x256xf32>,
    return
  }
  func.func @transform_0(%arg0: i32) -> (i32, i32) {
    %c0_i32 = arith.constant 0 : i32
    %c0_i32_0 = arith.constant 0 : i32
    return %arg0, %c0_i32 : i32, i32
  }
  func.func @transform_1(%arg0: i32) -> (i32, i32, i32) {
    %c0_i32 = arith.constant 0 : i32
    %c0_i32_0 = arith.constant 0 : i32
    %c0_i32_1 = arith.constant 0 : i32
    %c0_i32_2 = arith.constant 0 : i32
    return %c0_i32, %c0_i32_0, %c0_i32_1 : i32, i32, i32
  }
  func.func @transform_2(%arg0: i32) -> (i32, i32) {
    %c0_i32 = arith.constant 0 : i32
    %c0_i32_0 = arith.constant 0 : i32
    %c0_i32_1 = arith.constant 0 : i32
    return %c0_i32, %c0_i32_0 : i32, i32
  }
  func.func @transform_3(%arg0: i32) -> (i32, i32, i32) {
    %c0_i32 = arith.constant 0 : i32
    %c0_i32_0 = arith.constant 0 : i32
    %c0_i32_1 = arith.constant 0 : i32
    %c0_i32_2 = arith.constant 0 : i32
    return %c0_i32, %c0_i32_0, %c0_i32_1 : i32, i32, i32
  }
  func.func @transform_4(%arg0: i32) -> i32 {
    %c0_i32 = arith.constant 0 : i32
    %c0_i32_0 = arith.constant 0 : i32
    return %c0_i32 : i32
  }
  func.func @transform_5(%arg0: i32) -> (i32, i32) {
    %c0_i32 = arith.constant 0 : i32
    %c0_i32_0 = arith.constant 0 : i32
    %c0_i32_1 = arith.constant 0 : i32
    return %c0_i32, %c0_i32_0 : i32, i32
  }
  func.func @transform_6(%arg0: i32) -> (i32, i32) {
    %c0_i32 = arith.constant 0 : i32
    %c0_i32_0 = arith.constant 0 : i32
    %c0_i32_1 = arith.constant 0 : i32
    return %c0_i32, %c0_i32_0 : i32, i32
  }
  func.func @transform_7(%arg0: i32) -> (i32, i32) {
    %c0_i32 = arith.constant 0 : i32
    %c0_i32_0 = arith.constant 0 : i32
    return %arg0, %c0_i32 : i32, i32
  }
}

</mosaic_0001>

<llo_original>
// kernel: tpu_custom_call.1
$region0: #{tpu_custom_call.1}
  #allocation0 [shape = 'u32[]', space=smem, size = 0x4, offset = 0x4, fixed_abs, tag = 'smem constant byte address 0x4 - core index']
  #allocation1 [shape = 'u32[72,128]{1,0:T(1,128)}', space=vmem, size = 0x9000, scoped, tag = 'internal scratch']
  #allocation2 [shape = 'f32[2,4,512]{2,1,0:T(4,128)}', space=vmem, size = 0x4000, scoped, tag = 'scratch operand']
  #allocation3 [shape = 'f32[1]{0:T(128)S(6)}', space=smem, size = 0x200, scoped, tag = 'scoped memory for tpu_custom_call.1']
  %s0 = inlined_call_operand.vmem [shape: f32[2,512], index: 0, kind: input, shape index: {}]
  %s1 = inlined_call_operand.vmem [shape: f32[9,4,1], index: 1, kind: input, shape index: {}]
  %s2 = inlined_call_operand.vmem [shape: f32[4,1], index: 2, kind: input, shape index: {}]
  %s3 = inlined_call_operand.vmem [shape: f32[9,4,1], index: 3, kind: input, shape index: {}]
  %s4 = inlined_call_operand.<no memory space> [shape: f32[1], index: 4, kind: input, shape index: {}]
  %s5 = inlined_call_operand.vmem [shape: f32[1,256], index: 5, kind: input, shape index: {}]
  %s6 = inlined_call_operand.vmem [shape: f32[1,256], index: 6, kind: input, shape index: {}]
  %s7 = inlined_call_operand.hbm [shape: f32[2,256], index: 7, kind: output, shape index: {}]
  %s8 = sld [smem:[#allocation0]]
  $region38: #{tpu_custom_call.1} parent=0
    _
  %s10 = ssub.s32 1, %s8
  %s11 = scalar_select 0, %s10, %s8
  %12 = sst [smem:[#allocation3]] %s4
  $region1: #{tpu_custom_call.1} parent=0
    #allocation4 [shape = 'u8[2048]{0}', space=vmem, size = 0x800, scoped, tag = 'output window, operand 0, single buffered']
    #allocation5 [shape = 's32[1]{0}', space=sflag, size = 0x4, scoped, tag = 'scoped memory for tpu_custom_call.1']
    %13 = vsyncpa [#allocation5], 0
    // Predicated region
    $region2: #{tpu_custom_call.1} parent=1 // pred_check
      _
    $region3: #{tpu_custom_call.1} parent=1 // pred_check_branch
      %15 = sbr.rel (0) target = $region5
    $region4: #{tpu_custom_call.1} parent=1 // pred_region
      _
    $region5: #{tpu_custom_call.1} parent=1 // pred_fallthru
      _
    // Predicated region
    $region6: #{tpu_custom_call.1} parent=1 // pred_check
      _
    $region7: #{tpu_custom_call.1} parent=1 // pred_check_branch
      %17 = sbr.rel (0) target = $region9
    $region8: #{tpu_custom_call.1} parent=1 // pred_region
      _
    $region9: #{tpu_custom_call.1} parent=1 // pred_fallthru
      _
    // Predicated region
    $region10: #{tpu_custom_call.1} parent=1 // pred_check
      _
    $region11: #{tpu_custom_call.1} parent=1 // pred_check_branch
      %19 = sbr.rel (0) target = $region13
    $region12: #{tpu_custom_call.1} parent=1 // pred_region
      _
    $region13: #{tpu_custom_call.1} parent=1 // pred_fallthru
      _
    // Predicated region
    $region14: #{tpu_custom_call.1} parent=1 // pred_check
      _
    $region15: #{tpu_custom_call.1} parent=1 // pred_check_branch
      %21 = sbr.rel (0) target = $region17
    $region16: #{tpu_custom_call.1} parent=1 // pred_region
      _
    $region17: #{tpu_custom_call.1} parent=1 // pred_fallthru
      _
    // Predicated region
    $region18: #{tpu_custom_call.1} parent=1 // pred_check
      _
    $region19: #{tpu_custom_call.1} parent=1 // pred_check_branch
      %23 = sbr.rel (0) target = $region21
    $region20: #{tpu_custom_call.1} parent=1 // pred_region
      _
    $region21: #{tpu_custom_call.1} parent=1 // pred_fallthru
      _
    // Predicated region
    $region22: #{tpu_custom_call.1} parent=1 // pred_check
      _
    $region23: #{tpu_custom_call.1} parent=1 // pred_check_branch
      %25 = sbr.rel (0) target = $region25
    $region24: #{tpu_custom_call.1} parent=1 // pred_region
      _
    $region25: #{tpu_custom_call.1} parent=1 // pred_fallthru
      _
    // Predicated region
    $region26: #{tpu_custom_call.1} parent=1 // pred_check
      _
    $region27: #{tpu_custom_call.1} parent=1 // pred_check_branch
      %27 = sbr.rel (0) target = $region29
    $region28: #{tpu_custom_call.1} parent=1 // pred_region
      _
    $region29: #{tpu_custom_call.1} parent=1 // pred_fallthru
      _
    %v28 = vld [vmem:[%s5] sm:$0x3]
    %v29 = vld [vmem:[%s6] sm:$0x3]
    %v30 = vld [vmem:[%s1] sm:$0xf]
    %v31 = vld [vmem:[%s1 + $0x4] sm:$0xf]
    %v32 = vld [vmem:[%s1 + $0x8] sm:$0xf]
    %v33 = vld [vmem:[%s1 + $0xc] sm:$0xf]
    %v34 = vld [vmem:[%s1 + $0x10] sm:$0xf]
    %v35 = vld [vmem:[%s1 + $0x14] sm:$0xf]
    %v36 = vld [vmem:[%s1 + $0x18] sm:$0xf]
    %v37 = vld [vmem:[%s1 + $0x1c] sm:$0xf]
    %v38 = vld [vmem:[%s1 + $0x20] sm:$0xf]
    %v39 = vld [vmem:[%s3] sm:$0xf]
    %v40 = vld [vmem:[%s3 + $0x4] sm:$0xf]
    %v41 = vld [vmem:[%s3 + $0x8] sm:$0xf]
    %v42 = vld [vmem:[%s3 + $0xc] sm:$0xf]
    %v43 = vld [vmem:[%s3 + $0x10] sm:$0xf]
    %v44 = vld [vmem:[%s3 + $0x14] sm:$0xf]
    %v45 = vld [vmem:[%s3 + $0x18] sm:$0xf]
    %v46 = vld [vmem:[%s3 + $0x1c] sm:$0xf]
    %v47 = vld [vmem:[%s3 + $0x20] sm:$0xf]
    %v48 = vld [vmem:[%s0] sm:$0x3f]
    %v50 = vperm.slane %v28, 0
    %v51 = vperm.slane %v28, 1
    %v52 = vrot.slane %v51, 6
    %vm53 = vcmask 1041408
    %v54 = vsel %vm53, %v50, %v52
    %55 = vrot.lane.b32.xlu0 %v54, 111
    %v56 = vpop.permute.xlu0 %55
    %v57 = vrot.slane %v56, 6
    %vm58 = vcmask 908288
    %v59 = vsel %vm58, %v57, %v56
    %v61 = vmul.f32 %v48, %v59
    %v63 = vperm.slane %v29, 0
    %v64 = vperm.slane %v29, 1
    %v65 = vrot.slane %v64, 6
    %v66 = vsel %vm53, %v63, %v65
    %67 = vrot.lane.b32.xlu0 %v66, 113
    %v68 = vpop.permute.xlu0 %67
    %v69 = vrot.slane %v68, 6
    %vm70 = vcmask 924672
    %v71 = vsel %vm70, %v69, %v68
    %v73 = vmul.f32 %v48, %v71
    %74 = vrot.lane.b32.xlu0 %v54, 127
    %v75 = vpop.permute.xlu0 %74
    %v76 = vrot.slane %v75, 6
    %vm77 = vcmask 1039360
    %v78 = vsel %vm77, %v76, %v75
    %v80 = vmul.f32 %v48, %v78
    %v81 = vld [vmem:[%s0 + $0x2] sm:$0xf]
    %v82 = vld [vmem:[%s0 + $0x2] sm:$0x3f]
    %83 = vrot.lane.b32.xlu0 %v66, 1
    %v84 = vpop.permute.xlu0 %83
    %v85 = vrot.slane %v84, 6
    %vm86 = vcmask 7168
    %v87 = vsel %vm86, %v85, %v84
    %v89 = vmul.f32 %v82, %v87
    %90 = vrot.lane.b32.xlu0 %v54, 15
    %v91 = vpop.permute.xlu0 %90
    %v92 = vrot.slane %v91, 6
    %vm93 = vcmask 121856
    %v94 = vsel %vm93, %v92, %v91
    %v96 = vmul.f32 %v82, %v94
    %97 = vrot.lane.b32.xlu0 %v66, 17
    %v98 = vpop.permute.xlu0 %97
    %v99 = vrot.slane %v98, 6
    %vm100 = vcmask 138240
    %v101 = vsel %vm100, %v99, %v98
    %v103 = vmul.f32 %v82, %v101
    %v104 = vld [vmem:[%s2] sm:$0xf]
    %106 = vset.pattern.permute.xlu0 0
    %107 = vperm.xlu0 %106, %v104
    %v108 = vpop.permute.xlu0 %107
    %v111 = vrot.slane %v61, 1
    %v112 = vrot.slane %v61, 2
    %v113 = vrot.slane %v61, 3
    %vm114 = vcmask 1040384
    %v115 = vsel %vm114, %v61, %v111
    %vm116 = vcmask 1042434
    %v117 = vsel %vm116, %v112, %v113
    %v118 = vsel %vm53, %v115, %v117
    %vm119 = vcmask 1041409
    %v120 = vsel %vm119, %v61, %v111
    %vm121 = vcmask 1043459
    %v122 = vsel %vm121, %v112, %v113
    %vm123 = vcmask 1042433
    %v124 = vsel %vm123, %v120, %v122
    %v125 = vrot.slane %v124, 1
    %v126 = vperm.slane %v118, 0
    %v127 = vperm.slane %v118, 1
    %v128 = vperm.slane %v118, 2
    %v129 = vperm.slane %v125, 0
    %v130 = vperm.slane %v125, 1
    %v131 = vperm.slane %v125, 2
    %139 = vset.pattern.permute.xlu0 0
    %140 = vperm.xlu0 %139, %v30
    %v141 = vpop.permute.xlu0 %140
    %v143 = vmul.f32 %v126, %v141
    %v144 = vmul.f32 %v127, %v141
    %v145 = vmul.f32 %v128, %v141
    %v146 = vmul.f32 %v129, %v141
    %v147 = vmul.f32 %v130, %v141
    %v148 = vmul.f32 %v131, %v141
    %v149 = vadd.f32 %v108, %v143
    %v150 = vadd.f32 %v108, %v144
    %v151 = vadd.f32 %v108, %v145
    %v152 = vadd.f32 %v108, %v146
    %v153 = vadd.f32 %v108, %v147
    %v154 = vadd.f32 %v108, %v148
    %v156 = vrot.slane %v48, 1
    %v157 = vrot.slane %v48, 2
    %v158 = vrot.slane %v48, 3
    %v159 = vsel %vm114, %v48, %v156
    %v160 = vsel %vm116, %v157, %v158
    %v161 = vsel %vm53, %v159, %v160
    %v162 = vsel %vm119, %v48, %v156
    %v163 = vsel %vm121, %v157, %v158
    %v164 = vsel %vm123, %v162, %v163
    %v165 = vrot.slane %v164, 1
    %v166 = vperm.slane %v161, 0
    %v167 = vperm.slane %v161, 1
    %v168 = vperm.slane %v161, 2
    %v169 = vperm.slane %v165, 0
    %v170 = vperm.slane %v165, 1
    %v171 = vperm.slane %v165, 2
    %179 = vset.pattern.permute.xlu0 0
    %180 = vperm.xlu0 %179, %v31
    %v181 = vpop.permute.xlu0 %180
    %v183 = vmul.f32 %v166, %v181
    %v184 = vmul.f32 %v167, %v181
    %v185 = vmul.f32 %v168, %v181
    %v186 = vmul.f32 %v169, %v181
    %v187 = vmul.f32 %v170, %v181
    %v188 = vmul.f32 %v171, %v181
    %195 = vrot.lane.b32.xlu0 %v183, 127
    %v196 = vpop.permute.xlu0 %195
    %197 = vrot.lane.b32.xlu0 %v184, 127
    %v198 = vpop.permute.xlu0 %197
    %199 = vrot.lane.b32.xlu0 %v185, 127
    %v200 = vpop.permute.xlu0 %199
    %201 = vrot.lane.b32.xlu0 %v186, 127
    %v202 = vpop.permute.xlu0 %201
    %203 = vrot.lane.b32.xlu0 %v187, 127
    %v204 = vpop.permute.xlu0 %203
    %205 = vrot.lane.b32.xlu0 %v188, 127
    %v206 = vpop.permute.xlu0 %205
    %v207 = vsel %vm77, %v196, %v198
    %v208 = vsel %vm77, %v198, %v200
    %v209 = vsel %vm77, %v202, %v204
    %v210 = vsel %vm77, %v204, %v206
    %v217 = vadd.f32 %v149, %v207
    %v218 = vadd.f32 %v150, %v208
    %v219 = vadd.f32 %v151, %v200
    %v220 = vadd.f32 %v152, %v209
    %v221 = vadd.f32 %v153, %v210
    %v222 = vadd.f32 %v154, %v206
    %v224 = vrot.slane %v73, 1
    %v225 = vrot.slane %v73, 2
    %v226 = vrot.slane %v73, 3
    %v227 = vsel %vm114, %v73, %v224
    %v228 = vsel %vm116, %v225, %v226
    %v229 = vsel %vm53, %v227, %v228
    %v230 = vsel %vm119, %v73, %v224
    %v231 = vsel %vm121, %v225, %v226
    %v232 = vsel %vm123, %v230, %v231
    %v233 = vrot.slane %v232, 1
    %v234 = vperm.slane %v229, 0
    %v235 = vperm.slane %v229, 1
    %v236 = vperm.slane %v229, 2
    %v237 = vperm.slane %v233, 0
    %v238 = vperm.slane %v233, 1
    %v239 = vperm.slane %v233, 2
    %247 = vset.pattern.permute.xlu0 0
    %248 = vperm.xlu0 %247, %v32
    %v249 = vpop.permute.xlu0 %248
    %v251 = vmul.f32 %v234, %v249
    %v252 = vmul.f32 %v235, %v249
    %v253 = vmul.f32 %v236, %v249
    %v254 = vmul.f32 %v237, %v249
    %v255 = vmul.f32 %v238, %v249
    %v256 = vmul.f32 %v239, %v249
    %263 = vrot.lane.b32.xlu0 %v251, 126
    %v264 = vpop.permute.xlu0 %263
    %265 = vrot.lane.b32.xlu0 %v252, 126
    %v266 = vpop.permute.xlu0 %265
    %267 = vrot.lane.b32.xlu0 %v253, 126
    %v268 = vpop.permute.xlu0 %267
    %269 = vrot.lane.b32.xlu0 %v254, 126
    %v270 = vpop.permute.xlu0 %269
    %271 = vrot.lane.b32.xlu0 %v255, 126
    %v272 = vpop.permute.xlu0 %271
    %273 = vrot.lane.b32.xlu0 %v256, 126
    %v274 = vpop.permute.xlu0 %273
    %vm275 = vcmask 1031168
    %v276 = vsel %vm275, %v264, %v266
    %v277 = vsel %vm275, %v266, %v268
    %v278 = vsel %vm275, %v270, %v272
    %v279 = vsel %vm275, %v272, %v274
    %v286 = vadd.f32 %v217, %v276
    %v287 = vadd.f32 %v218, %v277
    %v288 = vadd.f32 %v219, %v268
    %v289 = vadd.f32 %v220, %v278
    %v290 = vadd.f32 %v221, %v279
    %v291 = vadd.f32 %v222, %v274
    %v293 = vrot.slane %v80, 1
    %v294 = vrot.slane %v80, 2
    %v295 = vrot.slane %v80, 3
    %v296 = vsel %vm114, %v80, %v293
    %v297 = vsel %vm116, %v294, %v295
    %v298 = vsel %vm53, %v296, %v297
    %v299 = vsel %vm119, %v80, %v293
    %v300 = vsel %vm121, %v294, %v295
    %v301 = vsel %vm123, %v299, %v300
    %v302 = vrot.slane %v301, 1
    %v303 = vperm.slane %v298, 0
    %v304 = vperm.slane %v298, 1
    %v305 = vperm.slane %v298, 2
    %v306 = vperm.slane %v302, 0
    %v307 = vperm.slane %v302, 1
    %v308 = vperm.slane %v302, 2
    %316 = vset.pattern.permute.xlu0 0
    %317 = vperm.xlu0 %316, %v33
    %v318 = vpop.permute.xlu0 %317
    %v320 = vmul.f32 %v303, %v318
    %v321 = vmul.f32 %v304, %v318
    %v322 = vmul.f32 %v305, %v318
    %v323 = vmul.f32 %v306, %v318
    %v324 = vmul.f32 %v307, %v318
    %v325 = vmul.f32 %v308, %v318
    %332 = vrot.lane.b32.xlu0 %v320, 112
    %v333 = vpop.permute.xlu0 %332
    %334 = vrot.lane.b32.xlu0 %v321, 112
    %v335 = vpop.permute.xlu0 %334
    %336 = vrot.lane.b32.xlu0 %v322, 112
    %v337 = vpop.permute.xlu0 %336
    %338 = vrot.lane.b32.xlu0 %v323, 112
    %v339 = vpop.permute.xlu0 %338
    %340 = vrot.lane.b32.xlu0 %v324, 112
    %v341 = vpop.permute.xlu0 %340
    %342 = vrot.lane.b32.xlu0 %v325, 112
    %v343 = vpop.permute.xlu0 %342
    %vm344 = vcmask 916480
    %v345 = vsel %vm344, %v333, %v335
    %v346 = vsel %vm344, %v335, %v337
    %v347 = vsel %vm344, %v339, %v341
    %v348 = vsel %vm344, %v341, %v343
    %v355 = vadd.f32 %v286, %v345
    %v356 = vadd.f32 %v287, %v346
    %v357 = vadd.f32 %v288, %v337
    %v358 = vadd.f32 %v289, %v347
    %v359 = vadd.f32 %v290, %v348
    %v360 = vadd.f32 %v291, %v343
    %v362 = vrot.slane %v81, 1
    %v363 = vrot.slane %v81, 2
    %v364 = vrot.slane %v81, 3
    %v365 = vsel %vm114, %v81, %v362
    %v366 = vsel %vm116, %v363, %v364
    %v367 = vsel %vm53, %v365, %v366
    %v368 = vsel %vm119, %v81, %v362
    %v369 = vsel %vm121, %v363, %v364
    %v370 = vsel %vm123, %v368, %v369
    %v371 = vrot.slane %v370, 1
    %v372 = vperm.slane %v367, 0
    %v373 = vperm.slane %v367, 1
    %v374 = vperm.slane %v371, 0
    %v375 = vperm.slane %v371, 1
    %381 = vset.pattern.permute.xlu0 0
    %382 = vperm.xlu0 %381, %v34
    %v383 = vpop.permute.xlu0 %382
    %v385 = vmul.f32 %v372, %v383
    %v386 = vmul.f32 %v373, %v383
    %v387 = vmul.f32 %v374, %v383
    %v388 = vmul.f32 %v375, %v383
    %393 = vrot.lane.b32.xlu0 %v385, 111
    %v394 = vpop.permute.xlu0 %393
    %395 = vrot.lane.b32.xlu0 %v386, 111
    %v396 = vpop.permute.xlu0 %395
    %397 = vrot.lane.b32.xlu0 %v387, 111
    %v398 = vpop.permute.xlu0 %397
    %399 = vrot.lane.b32.xlu0 %v388, 111
    %v400 = vpop.permute.xlu0 %399
    %v401 = vsel %vm58, %v394, %v396
    %v402 = vsel %vm58, %v398, %v400
    %v409 = vadd.f32 %v355, %v394
    %v410 = vadd.f32 %v356, %v401
    %v411 = vadd.f32 %v357, %v396
    %v412 = vadd.f32 %v358, %v398
    %v413 = vadd.f32 %v359, %v402
    %v414 = vadd.f32 %v360, %v400
    %v416 = vrot.slane %v89, 1
    %v417 = vrot.slane %v89, 2
    %v418 = vrot.slane %v89, 3
    %v419 = vsel %vm114, %v89, %v416
    %v420 = vsel %vm116, %v417, %v418
    %v421 = vsel %vm53, %v419, %v420
    %v422 = vsel %vm119, %v89, %v416
    %v423 = vsel %vm121, %v417, %v418
    %v424 = vsel %vm123, %v422, %v423
    %v425 = vrot.slane %v424, 1
    %v426 = vperm.slane %v421, 0
    %v427 = vperm.slane %v421, 1
    %v428 = vperm.slane %v421, 2
    %v429 = vperm.slane %v425, 0
    %v430 = vperm.slane %v425, 1
    %v431 = vperm.slane %v425, 2
    %439 = vset.pattern.permute.xlu0 0
    %440 = vperm.xlu0 %439, %v35
    %v441 = vpop.permute.xlu0 %440
    %v443 = vmul.f32 %v426, %v441
    %v444 = vmul.f32 %v427, %v441
    %v445 = vmul.f32 %v428, %v441
    %v446 = vmul.f32 %v429, %v441
    %v447 = vmul.f32 %v430, %v441
    %v448 = vmul.f32 %v431, %v441
    %455 = vrot.lane.b32.xlu0 %v443, 110
    %v456 = vpop.permute.xlu0 %455
    %457 = vrot.lane.b32.xlu0 %v444, 110
    %v458 = vpop.permute.xlu0 %457
    %459 = vrot.lane.b32.xlu0 %v445, 110
    %v460 = vpop.permute.xlu0 %459
    %461 = vrot.lane.b32.xlu0 %v446, 110
    %v462 = vpop.permute.xlu0 %461
    %463 = vrot.lane.b32.xlu0 %v447, 110
    %v464 = vpop.permute.xlu0 %463
    %465 = vrot.lane.b32.xlu0 %v448, 110
    %v466 = vpop.permute.xlu0 %465
    %vm467 = vcmask 900096
    %v468 = vsel %vm467, %v456, %v458
    %v469 = vsel %vm467, %v458, %v460
    %v470 = vsel %vm467, %v462, %v464
    %v471 = vsel %vm467, %v464, %v466
    %v478 = vadd.f32 %v409, %v456
    %v479 = vadd.f32 %v410, %v468
    %v480 = vadd.f32 %v411, %v469
    %v481 = vadd.f32 %v412, %v462
    %v482 = vadd.f32 %v413, %v470
    %v483 = vadd.f32 %v414, %v471
    %v485 = vrot.slane %v96, 1
    %v486 = vrot.slane %v96, 2
    %v487 = vrot.slane %v96, 3
    %v488 = vsel %vm114, %v96, %v485
    %v489 = vsel %vm116, %v486, %v487
    %v490 = vsel %vm53, %v488, %v489
    %v491 = vsel %vm119, %v96, %v485
    %v492 = vsel %vm121, %v486, %v487
    %v493 = vsel %vm123, %v491, %v492
    %v494 = vrot.slane %v493, 1
    %v495 = vperm.slane %v490, 0
    %v496 = vperm.slane %v490, 1
    %v497 = vperm.slane %v490, 2
    %v498 = vperm.slane %v494, 0
    %v499 = vperm.slane %v494, 1
    %v500 = vperm.slane %v494, 2
    %508 = vset.pattern.permute.xlu0 0
    %509 = vperm.xlu0 %508, %v36
    %v510 = vpop.permute.xlu0 %509
    %v512 = vmul.f32 %v495, %v510
    %v513 = vmul.f32 %v496, %v510
    %v514 = vmul.f32 %v497, %v510
    %v515 = vmul.f32 %v498, %v510
    %v516 = vmul.f32 %v499, %v510
    %v517 = vmul.f32 %v500, %v510
    %524 = vrot.lane.b32.xlu0 %v512, 96
    %v525 = vpop.permute.xlu0 %524
    %526 = vrot.lane.b32.xlu0 %v513, 96
    %v527 = vpop.permute.xlu0 %526
    %528 = vrot.lane.b32.xlu0 %v514, 96
    %v529 = vpop.permute.xlu0 %528
    %530 = vrot.lane.b32.xlu0 %v515, 96
    %v531 = vpop.permute.xlu0 %530
    %532 = vrot.lane.b32.xlu0 %v516, 96
    %v533 = vpop.permute.xlu0 %532
    %534 = vrot.lane.b32.xlu0 %v517, 96
    %v535 = vpop.permute.xlu0 %534
    %vm536 = vcmask 785408
    %v537 = vsel %vm536, %v525, %v527
    %v538 = vsel %vm536, %v527, %v529
    %v539 = vsel %vm536, %v531, %v533
    %v540 = vsel %vm536, %v533, %v535
    %v547 = vadd.f32 %v478, %v525
    %v548 = vadd.f32 %v479, %v537
    %v549 = vadd.f32 %v480, %v538
    %v550 = vadd.f32 %v481, %v531
    %v551 = vadd.f32 %v482, %v539
    %v552 = vadd.f32 %v483, %v540
    %v554 = vrot.slane %v82, 1
    %v555 = vrot.slane %v82, 2
    %v556 = vrot.slane %v82, 3
    %v557 = vsel %vm114, %v82, %v554
    %v558 = vsel %vm116, %v555, %v556
    %v559 = vsel %vm53, %v557, %v558
    %v560 = vsel %vm119, %v82, %v554
    %v561 = vsel %vm121, %v555, %v556
    %v562 = vsel %vm123, %v560, %v561
    %v563 = vrot.slane %v562, 1
    %v564 = vperm.slane %v559, 0
    %v565 = vperm.slane %v559, 1
    %v566 = vperm.slane %v559, 2
    %v567 = vperm.slane %v563, 0
    %v568 = vperm.slane %v563, 1
    %v569 = vperm.slane %v563, 2
    %577 = vset.pattern.permute.xlu0 0
    %578 = vperm.xlu0 %577, %v37
    %v579 = vpop.permute.xlu0 %578
    %v581 = vmul.f32 %v564, %v579
    %v582 = vmul.f32 %v565, %v579
    %v583 = vmul.f32 %v566, %v579
    %v584 = vmul.f32 %v567, %v579
    %v585 = vmul.f32 %v568, %v579
    %v586 = vmul.f32 %v569, %v579
    %593 = vrot.lane.b32.xlu0 %v581, 95
    %v594 = vpop.permute.xlu0 %593
    %595 = vrot.lane.b32.xlu0 %v582, 95
    %v596 = vpop.permute.xlu0 %595
    %597 = vrot.lane.b32.xlu0 %v583, 95
    %v598 = vpop.permute.xlu0 %597
    %599 = vrot.lane.b32.xlu0 %v584, 95
    %v600 = vpop.permute.xlu0 %599
    %601 = vrot.lane.b32.xlu0 %v585, 95
    %v602 = vpop.permute.xlu0 %601
    %603 = vrot.lane.b32.xlu0 %v586, 95
    %v604 = vpop.permute.xlu0 %603
    %vm605 = vcmask 777216
    %v606 = vsel %vm605, %v594, %v596
    %v607 = vsel %vm605, %v596, %v598
    %v608 = vsel %vm605, %v600, %v602
    %v609 = vsel %vm605, %v602, %v604
    %v616 = vadd.f32 %v547, %v594
    %v617 = vadd.f32 %v548, %v606
    %v618 = vadd.f32 %v549, %v607
    %v619 = vadd.f32 %v550, %v600
    %v620 = vadd.f32 %v551, %v608
    %v621 = vadd.f32 %v552, %v609
    %v623 = vrot.slane %v103, 1
    %v624 = vrot.slane %v103, 2
    %v625 = vrot.slane %v103, 3
    %v626 = vsel %vm114, %v103, %v623
    %v627 = vsel %vm116, %v624, %v625
    %v628 = vsel %vm53, %v626, %v627
    %v629 = vsel %vm119, %v103, %v623
    %v630 = vsel %vm121, %v624, %v625
    %v631 = vsel %vm123, %v629, %v630
    %v632 = vrot.slane %v631, 1
    %v633 = vperm.slane %v628, 0
    %v634 = vperm.slane %v628, 1
    %v635 = vperm.slane %v628, 2
    %v636 = vperm.slane %v632, 0
    %v637 = vperm.slane %v632, 1
    %v638 = vperm.slane %v632, 2
    %646 = vset.pattern.permute.xlu0 0
    %647 = vperm.xlu0 %646, %v38
    %v648 = vpop.permute.xlu0 %647
    %v650 = vmul.f32 %v633, %v648
    %v651 = vmul.f32 %v634, %v648
    %v652 = vmul.f32 %v635, %v648
    %v653 = vmul.f32 %v636, %v648
    %v654 = vmul.f32 %v637, %v648
    %v655 = vmul.f32 %v638, %v648
    %662 = vrot.lane.b32.xlu0 %v650, 94
    %v663 = vpop.permute.xlu0 %662
    %664 = vrot.lane.b32.xlu0 %v651, 94
    %v665 = vpop.permute.xlu0 %664
    %666 = vrot.lane.b32.xlu0 %v652, 94
    %v667 = vpop.permute.xlu0 %666
    %668 = vrot.lane.b32.xlu0 %v653, 94
    %v669 = vpop.permute.xlu0 %668
    %670 = vrot.lane.b32.xlu0 %v654, 94
    %v671 = vpop.permute.xlu0 %670
    %672 = vrot.lane.b32.xlu0 %v655, 94
    %v673 = vpop.permute.xlu0 %672
    %vm674 = vcmask 769024
    %v675 = vsel %vm674, %v663, %v665
    %v676 = vsel %vm674, %v665, %v667
    %v677 = vsel %vm674, %v669, %v671
    %v678 = vsel %vm674, %v671, %v673
    %v685 = vadd.f32 %v616, %v663
    %v686 = vadd.f32 %v617, %v675
    %v687 = vadd.f32 %v618, %v676
    %v688 = vadd.f32 %v619, %v669
    %v689 = vadd.f32 %v620, %v677
    %v690 = vadd.f32 %v621, %v678
    %v691 = vmax.f32 %v685, 0.0
    %v692 = vmax.f32 %v686, 0.0
    %v693 = vmax.f32 %v687, 0.0
    %v694 = vmax.f32 %v688, 0.0
    %v695 = vmax.f32 %v689, 0.0
    %v696 = vmax.f32 %v690, 0.0
    %697 = vst [vmem:[#allocation2] sm:$0xf] 0.0
    %698 = vst [vmem:[#allocation2 + $0x10] sm:$0xf] 0.0
    %699 = vst [vmem:[#allocation2 + $0xc] sm:$0xf] 0.0
    %700 = vst [vmem:[#allocation2 + $0x1c] sm:$0xf] 0.0
    %v707 = vrot.slane %v692, 4
    %v708 = vrot.slane %v695, 4
    %vm709 = vcmask 1043456
    %v710 = vsel %vm709, %v691, %v707
    %v711 = vsel %vm709, %v694, %v708
    %712 = vrot.lane.b32.xlu0 %v710, 17
    %v713 = vpop.permute.xlu0 %712
    %714 = vrot.lane.b32.xlu0 %v693, 17
    %v715 = vpop.permute.xlu0 %714
    %716 = vrot.lane.b32.xlu0 %v711, 17
    %v717 = vpop.permute.xlu0 %716
    %718 = vrot.lane.b32.xlu0 %v696, 17
    %v719 = vpop.permute.xlu0 %718
    %v720 = vrot.slane %v713, 4
    %v721 = vrot.slane %v715, 4
    %v722 = vrot.slane %v717, 4
    %v723 = vrot.slane %v719, 4
    %v724 = vsel %vm709, %v720, %v721
    %v725 = vsel %vm100, %v713, %v724
    %v726 = vsel %vm709, %v722, %v723
    %v727 = vsel %vm100, %v717, %v726
    %730 = vst [vmem:[#allocation2 + $0x4] sm:$0xff] %v725
    %731 = vst [vmem:[#allocation2 + $0x14] sm:$0xff] %v727
    %v732 = vld [vmem:[#allocation2] sm:$0xff]
    %v733 = vld [vmem:[#allocation2 + $0x8] sm:$0xf]
    %v734 = vld [vmem:[#allocation2 + $0x10] sm:$0xff]
    %v735 = vld [vmem:[#allocation2 + $0x18] sm:$0xf]
    %737 = vset.pattern.permute.xlu0 0
    %738 = vperm.xlu0 %737, %v39
    %v739 = vpop.permute.xlu0 %738
    %v741 = vunpack.c.l.s4 839922192
    %v742 = vunpack.c.0.s8 %v741
    %v743 = vperm.slane %v739, %v742
    %v745 = vmul.f32 %v732, %v743
    %v746 = vmul.f32 %v733, %v743
    %v747 = vmul.f32 %v734, %v743
    %v748 = vmul.f32 %v735, %v743
    %v749 = vrot.slane %v51, 4
    %v750 = vsel %vm709, %v50, %v749
    %751 = vrot.lane.b32.xlu0 %v750, 111
    %v752 = vpop.permute.xlu0 %751
    %v753 = vrot.slane %v752, 4
    %v754 = vsel %vm58, %v753, %v752
    %v757 = vmul.f32 %v745, %v754
    %v758 = vmul.f32 %v746, %v753
    %v759 = vmul.f32 %v747, %v754
    %v760 = vmul.f32 %v748, %v753
    %v761 = vadd.f32 %v757, 0.0
    %v762 = vadd.f32 %v758, 0.0
    %v763 = vadd.f32 %v759, 0.0
    %v764 = vadd.f32 %v760, 0.0
    %766 = vset.pattern.permute.xlu0 0
    %767 = vperm.xlu0 %766, %v40
    %v768 = vpop.permute.xlu0 %767
    %v770 = vunpack.c.l.s4 839922192
    %v771 = vunpack.c.0.s8 %v770
    %v772 = vperm.slane %v768, %v771
    %v774 = vmul.f32 %v732, %v772
    %v775 = vmul.f32 %v733, %v772
    %v776 = vmul.f32 %v734, %v772
    %v777 = vmul.f32 %v735, %v772
    %782 = vrot.lane.b32.xlu0 %v774, 127
    %v783 = vpop.permute.xlu0 %782
    %784 = vrot.lane.b32.xlu0 %v775, 127
    %v785 = vpop.permute.xlu0 %784
    %786 = vrot.lane.b32.xlu0 %v776, 127
    %v787 = vpop.permute.xlu0 %786
    %788 = vrot.lane.b32.xlu0 %v777, 127
    %v789 = vpop.permute.xlu0 %788
    %v790 = vrot.slane %v783, 4
    %v791 = vrot.slane %v785, 4
    %v792 = vrot.slane %v787, 4
    %v793 = vrot.slane %v789, 4
    %v794 = vsel %vm709, %v790, %v791
    %v795 = vsel %vm77, %v783, %v794
    %v796 = vsel %vm709, %v792, %v793
    %v797 = vsel %vm77, %v787, %v796
    %v802 = vadd.f32 %v761, %v795
    %v803 = vadd.f32 %v762, %v785
    %v804 = vadd.f32 %v763, %v797
    %v805 = vadd.f32 %v764, %v789
    %807 = vset.pattern.permute.xlu0 0
    %808 = vperm.xlu0 %807, %v41
    %v809 = vpop.permute.xlu0 %808
    %v811 = vunpack.c.l.s4 839922192
    %v812 = vunpack.c.0.s8 %v811
    %v813 = vperm.slane %v809, %v812
    %v815 = vmul.f32 %v732, %v813
    %v816 = vmul.f32 %v733, %v813
    %v817 = vmul.f32 %v734, %v813
    %v818 = vmul.f32 %v735, %v813
    %v819 = vrot.slane %v64, 4
    %v820 = vsel %vm709, %v63, %v819
    %821 = vrot.lane.b32.xlu0 %v820, 113
    %v822 = vpop.permute.xlu0 %821
    %v823 = vrot.slane %v822, 4
    %v824 = vsel %vm70, %v823, %v822
    %v827 = vmul.f32 %v815, %v824
    %v828 = vmul.f32 %v816, %v823
    %v829 = vmul.f32 %v817, %v824
    %v830 = vmul.f32 %v818, %v823
    %835 = vrot.lane.b32.xlu0 %v827, 126
    %v836 = vpop.permute.xlu0 %835
    %837 = vrot.lane.b32.xlu0 %v828, 126
    %v838 = vpop.permute.xlu0 %837
    %839 = vrot.lane.b32.xlu0 %v829, 126
    %v840 = vpop.permute.xlu0 %839
    %841 = vrot.lane.b32.xlu0 %v830, 126
    %v842 = vpop.permute.xlu0 %841
    %v843 = vrot.slane %v836, 4
    %v844 = vrot.slane %v838, 4
    %v845 = vrot.slane %v840, 4
    %v846 = vrot.slane %v842, 4
    %v847 = vsel %vm709, %v843, %v844
    %v848 = vsel %vm275, %v836, %v847
    %v849 = vsel %vm709, %v845, %v846
    %v850 = vsel %vm275, %v840, %v849
    %v855 = vadd.f32 %v802, %v848
    %v856 = vadd.f32 %v803, %v838
    %v857 = vadd.f32 %v804, %v850
    %v858 = vadd.f32 %v805, %v842
    %860 = vset.pattern.permute.xlu0 0
    %861 = vperm.xlu0 %860, %v42
    %v862 = vpop.permute.xlu0 %861
    %v864 = vunpack.c.l.s4 839922192
    %v865 = vunpack.c.0.s8 %v864
    %v866 = vperm.slane %v862, %v865
    %v868 = vmul.f32 %v732, %v866
    %v869 = vmul.f32 %v733, %v866
    %v870 = vmul.f32 %v734, %v866
    %v871 = vmul.f32 %v735, %v866
    %872 = vrot.lane.b32.xlu0 %v750, 127
    %v873 = vpop.permute.xlu0 %872
    %v874 = vrot.slane %v873, 4
    %v875 = vsel %vm77, %v874, %v873
    %v878 = vmul.f32 %v868, %v875
    %v879 = vmul.f32 %v869, %v874
    %v880 = vmul.f32 %v870, %v875
    %v881 = vmul.f32 %v871, %v874
    %886 = vrot.lane.b32.xlu0 %v878, 112
    %v887 = vpop.permute.xlu0 %886
    %888 = vrot.lane.b32.xlu0 %v879, 112
    %v889 = vpop.permute.xlu0 %888
    %890 = vrot.lane.b32.xlu0 %v880, 112
    %v891 = vpop.permute.xlu0 %890
    %892 = vrot.lane.b32.xlu0 %v881, 112
    %v893 = vpop.permute.xlu0 %892
    %v894 = vrot.slane %v887, 4
    %v895 = vrot.slane %v889, 4
    %v896 = vrot.slane %v891, 4
    %v897 = vrot.slane %v893, 4
    %v898 = vsel %vm709, %v894, %v895
    %v899 = vsel %vm344, %v887, %v898
    %v900 = vsel %vm709, %v896, %v897
    %v901 = vsel %vm344, %v891, %v900
    %v906 = vadd.f32 %v855, %v899
    %v907 = vadd.f32 %v856, %v889
    %v908 = vadd.f32 %v857, %v901
    %v909 = vadd.f32 %v858, %v893
    %v910 = vld [vmem:[#allocation2 + $0x4] sm:$0xff]
    %v911 = vld [vmem:[#allocation2 + $0x14] sm:$0xff]
    %913 = vset.pattern.permute.xlu0 0
    %914 = vperm.xlu0 %913, %v43
    %v915 = vpop.permute.xlu0 %914
    %v917 = vunpack.c.l.s4 839922192
    %v918 = vunpack.c.0.s8 %v917
    %v919 = vperm.slane %v915, %v918
    %v921 = vmul.f32 %v910, %v919
    %v922 = vmul.f32 %v911, %v919
    %925 = vrot.lane.b32.xlu0 %v921, 111
    %v926 = vpop.permute.xlu0 %925
    %927 = vrot.lane.b32.xlu0 %v922, 111
    %v928 = vpop.permute.xlu0 %927
    %v929 = vrot.slane %v926, 4
    %v930 = vrot.slane %v928, 4
    %v931 = vsel %vm58, %v929, %v926
    %v932 = vsel %vm58, %v930, %v928
    %v937 = vadd.f32 %v906, %v931
    %v938 = vadd.f32 %v907, %v929
    %v939 = vadd.f32 %v908, %v932
    %v940 = vadd.f32 %v909, %v930
    %v941 = vld [vmem:[#allocation2 + $0x4] sm:$0xff]
    %v942 = vld [vmem:[#allocation2 + $0xc] sm:$0xf]
    %v943 = vld [vmem:[#allocation2 + $0x14] sm:$0xff]
    %v944 = vld [vmem:[#allocation2 + $0x1c] sm:$0xf]
    %946 = vset.pattern.permute.xlu0 0
    %947 = vperm.xlu0 %946, %v44
    %v948 = vpop.permute.xlu0 %947
    %v950 = vunpack.c.l.s4 839922192
    %v951 = vunpack.c.0.s8 %v950
    %v952 = vperm.slane %v948, %v951
    %v954 = vmul.f32 %v941, %v952
    %v955 = vmul.f32 %v942, %v952
    %v956 = vmul.f32 %v943, %v952
    %v957 = vmul.f32 %v944, %v952
    %958 = vrot.lane.b32.xlu0 %v820, 1
    %v959 = vpop.permute.xlu0 %958
    %v960 = vrot.slane %v959, 4
    %v961 = vsel %vm86, %v960, %v959
    %v964 = vmul.f32 %v954, %v961
    %v965 = vmul.f32 %v955, %v960
    %v966 = vmul.f32 %v956, %v961
    %v967 = vmul.f32 %v957, %v960
    %972 = vrot.lane.b32.xlu0 %v964, 110
    %v973 = vpop.permute.xlu0 %972
    %974 = vrot.lane.b32.xlu0 %v965, 110
    %v975 = vpop.permute.xlu0 %974
    %976 = vrot.lane.b32.xlu0 %v966, 110
    %v977 = vpop.permute.xlu0 %976
    %978 = vrot.lane.b32.xlu0 %v967, 110
    %v979 = vpop.permute.xlu0 %978
    %v980 = vrot.slane %v973, 4
    %v981 = vrot.slane %v977, 4
    %v982 = vsel %vm467, %v980, %v973
    %v983 = vsel %vm467, %v980, %v975
    %v984 = vsel %vm467, %v981, %v977
    %v985 = vsel %vm467, %v981, %v979
    %v990 = vadd.f32 %v937, %v982
    %v991 = vadd.f32 %v938, %v983
    %v992 = vadd.f32 %v939, %v984
    %v993 = vadd.f32 %v940, %v985
    %995 = vset.pattern.permute.xlu0 0
    %996 = vperm.xlu0 %995, %v45
    %v997 = vpop.permute.xlu0 %996
    %v999 = vunpack.c.l.s4 839922192
    %v1000 = vunpack.c.0.s8 %v999
    %v1001 = vperm.slane %v997, %v1000
    %v1003 = vmul.f32 %v941, %v1001
    %v1004 = vmul.f32 %v942, %v1001
    %v1005 = vmul.f32 %v943, %v1001
    %v1006 = vmul.f32 %v944, %v1001
    %1007 = vrot.lane.b32.xlu0 %v750, 15
    %v1008 = vpop.permute.xlu0 %1007
    %v1009 = vrot.slane %v1008, 4
    %v1010 = vsel %vm93, %v1009, %v1008
    %v1013 = vmul.f32 %v1003, %v1010
    %v1014 = vmul.f32 %v1004, %v1009
    %v1015 = vmul.f32 %v1005, %v1010
    %v1016 = vmul.f32 %v1006, %v1009
    %1021 = vrot.lane.b32.xlu0 %v1013, 96
    %v1022 = vpop.permute.xlu0 %1021
    %1023 = vrot.lane.b32.xlu0 %v1014, 96
    %v1024 = vpop.permute.xlu0 %1023
    %1025 = vrot.lane.b32.xlu0 %v1015, 96
    %v1026 = vpop.permute.xlu0 %1025
    %1027 = vrot.lane.b32.xlu0 %v1016, 96
    %v1028 = vpop.permute.xlu0 %1027
    %v1029 = vrot.slane %v1022, 4
    %v1030 = vrot.slane %v1026, 4
    %v1031 = vsel %vm536, %v1029, %v1022
    %v1032 = vsel %vm536, %v1029, %v1024
    %v1033 = vsel %vm536, %v1030, %v1026
    %v1034 = vsel %vm536, %v1030, %v1028
    %v1039 = vadd.f32 %v990, %v1031
    %v1040 = vadd.f32 %v991, %v1032
    %v1041 = vadd.f32 %v992, %v1033
    %v1042 = vadd.f32 %v993, %v1034
    %1044 = vset.pattern.permute.xlu0 0
    %1045 = vperm.xlu0 %1044, %v46
    %v1046 = vpop.permute.xlu0 %1045
    %v1048 = vunpack.c.l.s4 839922192
    %v1049 = vunpack.c.0.s8 %v1048
    %v1050 = vperm.slane %v1046, %v1049
    %v1052 = vmul.f32 %v941, %v1050
    %v1053 = vmul.f32 %v942, %v1050
    %v1054 = vmul.f32 %v943, %v1050
    %v1055 = vmul.f32 %v944, %v1050
    %1060 = vrot.lane.b32.xlu0 %v1052, 95
    %v1061 = vpop.permute.xlu0 %1060
    %1062 = vrot.lane.b32.xlu0 %v1053, 95
    %v1063 = vpop.permute.xlu0 %1062
    %1064 = vrot.lane.b32.xlu0 %v1054, 95
    %v1065 = vpop.permute.xlu0 %1064
    %1066 = vrot.lane.b32.xlu0 %v1055, 95
    %v1067 = vpop.permute.xlu0 %1066
    %v1068 = vrot.slane %v1061, 4
    %v1069 = vrot.slane %v1065, 4
    %v1070 = vsel %vm605, %v1068, %v1061
    %v1071 = vsel %vm605, %v1068, %v1063
    %v1072 = vsel %vm605, %v1069, %v1065
    %v1073 = vsel %vm605, %v1069, %v1067
    %v1078 = vadd.f32 %v1039, %v1070
    %v1079 = vadd.f32 %v1040, %v1071
    %v1080 = vadd.f32 %v1041, %v1072
    %v1081 = vadd.f32 %v1042, %v1073
    %1083 = vset.pattern.permute.xlu0 0
    %1084 = vperm.xlu0 %1083, %v47
    %v1085 = vpop.permute.xlu0 %1084
    %v1087 = vunpack.c.l.s4 839922192
    %v1088 = vunpack.c.0.s8 %v1087
    %v1089 = vperm.slane %v1085, %v1088
    %v1091 = vmul.f32 %v941, %v1089
    %v1092 = vmul.f32 %v942, %v1089
    %v1093 = vmul.f32 %v943, %v1089
    %v1094 = vmul.f32 %v944, %v1089
    %1095 = vrot.lane.b32.xlu0 %v820, 17
    %v1096 = vpop.permute.xlu0 %1095
    %v1097 = vrot.slane %v1096, 4
    %v1098 = vsel %vm100, %v1097, %v1096
    %v1101 = vmul.f32 %v1091, %v1098
    %v1102 = vmul.f32 %v1092, %v1097
    %v1103 = vmul.f32 %v1093, %v1098
    %v1104 = vmul.f32 %v1094, %v1097
    %1109 = vrot.lane.b32.xlu0 %v1101, 94
    %v1110 = vpop.permute.xlu0 %1109
    %1111 = vrot.lane.b32.xlu0 %v1102, 94
    %v1112 = vpop.permute.xlu0 %1111
    %1113 = vrot.lane.b32.xlu0 %v1103, 94
    %v1114 = vpop.permute.xlu0 %1113
    %1115 = vrot.lane.b32.xlu0 %v1104, 94
    %v1116 = vpop.permute.xlu0 %1115
    %v1117 = vrot.slane %v1110, 4
    %v1118 = vrot.slane %v1114, 4
    %v1119 = vsel %vm674, %v1117, %v1110
    %v1120 = vsel %vm674, %v1117, %v1112
    %v1121 = vsel %vm674, %v1118, %v1114
    %v1122 = vsel %vm674, %v1118, %v1116
    %v1127 = vadd.f32 %v1078, %v1119
    %v1128 = vadd.f32 %v1079, %v1120
    %v1129 = vadd.f32 %v1080, %v1121
    %v1130 = vadd.f32 %v1081, %v1122
    %1135 = vst [vmem:[#allocation1] ss:$2 sm:$0xff] %v1127
    %s1136 = scalar_lea.vmem [#allocation1], 16
    %1137 = vst [vmem:[%s1136] ss:$2 sm:$0xff] %v1128
    %v1138 = vld.sshfl [vmem:[#allocation1] sm:$0xff pattern:$0x75316420]
    %v1139 = vld.sshfl [vmem:[#allocation1 + $0x8] sm:$0xff pattern:$0x75316420]
    %v1140 = vld.sshfl [vmem:[#allocation1 + $0x10] sm:$0xff pattern:$0x75316420]
    %s1141 = scalar_lea.vmem [#allocation1], 32
    %1142 = vst [vmem:[%s1141] ss:$2 sm:$0xff] %v1129
    %s1143 = scalar_lea.vmem [#allocation1], 48
    %1144 = vst [vmem:[%s1143] ss:$2 sm:$0xff] %v1130
    %v1145 = vld.sshfl [vmem:[#allocation1 + $0x20] sm:$0xff pattern:$0x75316420]
    %v1146 = vld.sshfl [vmem:[#allocation1 + $0x28] sm:$0xff pattern:$0x75316420]
    %v1147 = vld.sshfl [vmem:[#allocation1 + $0x30] sm:$0xff pattern:$0x75316420]
    %vm1154 = vcmask 1044344
    %v1155 = vsel %vm1154, %v1138, 0.0
    %v1156 = vrot.slane %v1155, 4
    %v1157 = vadd.f32 %v1155, %v1156
    %v1158 = vrot.slane %v1157, 2
    %v1159 = vadd.f32 %v1157, %v1158
    %v1160 = vrot.slane %v1159, 1
    %v1161 = vadd.f32 %v1159, %v1160
    %v1162 = vsel %vm709, %v1139, 0.0
    %v1163 = vrot.slane %v1162, 4
    %v1164 = vadd.f32 %v1162, %v1163
    %v1165 = vrot.slane %v1164, 2
    %v1166 = vadd.f32 %v1164, %v1165
    %v1167 = vrot.slane %v1166, 1
    %v1168 = vadd.f32 %v1166, %v1167
    %vm1169 = vcmask 904192
    %v1170 = vsel %vm1169, %v1140, 0.0
    %v1171 = vrot.slane %v1170, 4
    %v1172 = vadd.f32 %v1170, %v1171
    %v1173 = vrot.slane %v1172, 2
    %v1174 = vadd.f32 %v1172, %v1173
    %v1175 = vrot.slane %v1174, 1
    %v1176 = vadd.f32 %v1174, %v1175
    %v1177 = vsel %vm1154, %v1145, 0.0
    %v1178 = vrot.slane %v1177, 4
    %v1179 = vadd.f32 %v1177, %v1178
    %v1180 = vrot.slane %v1179, 2
    %v1181 = vadd.f32 %v1179, %v1180
    %v1182 = vrot.slane %v1181, 1
    %v1183 = vadd.f32 %v1181, %v1182
    %v1184 = vsel %vm709, %v1146, 0.0
    %v1185 = vrot.slane %v1184, 4
    %v1186 = vadd.f32 %v1184, %v1185
    %v1187 = vrot.slane %v1186, 2
    %v1188 = vadd.f32 %v1186, %v1187
    %v1189 = vrot.slane %v1188, 1
    %v1190 = vadd.f32 %v1188, %v1189
    %v1191 = vsel %vm1169, %v1147, 0.0
    %v1192 = vrot.slane %v1191, 4
    %v1193 = vadd.f32 %v1191, %v1192
    %v1194 = vrot.slane %v1193, 2
    %v1195 = vadd.f32 %v1193, %v1194
    %v1196 = vrot.slane %v1195, 1
    %v1197 = vadd.f32 %v1195, %v1196
    %s1198 = sld [smem:[#allocation3]]
    %v1199 = vstv %s1198
    %v1200 = vadd.f32 %v1161, %v1199
    %v1201 = vadd.f32 %v1168, %v1199
    %v1202 = vadd.f32 %v1176, %v1199
    %v1203 = vadd.f32 %v1183, %v1199
    %v1204 = vadd.f32 %v1190, %v1199
    %v1205 = vadd.f32 %v1197, %v1199
    %v1206 = vxor.u32 %v1200, 2147483648
    %v1207 = vxor.u32 %v1201, 2147483648
    %v1208 = vxor.u32 %v1202, 2147483648
    %v1209 = vxor.u32 %v1203, 2147483648
    %v1210 = vxor.u32 %v1204, 2147483648
    %v1211 = vxor.u32 %v1205, 2147483648
    %v1212 = vmul.f32 %v1206, 1.442695
    %v1213 = vpow.pop %v1212
    %v1214 = vmul.f32 %v1207, 1.442695
    %v1215 = vpow.pop %v1214
    %v1216 = vmul.f32 %v1208, 1.442695
    %v1217 = vpow.pop %v1216
    %v1218 = vmul.f32 %v1209, 1.442695
    %v1219 = vpow.pop %v1218
    %v1220 = vmul.f32 %v1210, 1.442695
    %v1221 = vpow.pop %v1220
    %v1222 = vmul.f32 %v1211, 1.442695
    %v1223 = vpow.pop %v1222
    %v1224 = vadd.f32 %v1213, 1.0
    %v1225 = vadd.f32 %v1215, 1.0
    %v1226 = vadd.f32 %v1217, 1.0
    %v1227 = vadd.f32 %v1219, 1.0
    %v1228 = vadd.f32 %v1221, 1.0
    %v1229 = vadd.f32 %v1223, 1.0
    %v1230 = vrcp.pop %v1224
    %v1231 = vmul.f32 %v1224, %v1230
    %v1232 = vsub.f32 1.0, %v1231
    %v1233 = vmul.f32 %v1230, %v1232
    %v1234 = vadd.f32 %v1230, %v1233
    %vm1235 = vweird.f32 %v1224
    %vm1236 = vweird.f32 %v1230
    %vm1237 = vmor %vm1235, %vm1236
    %v1238 = vsel %vm1237, %v1230, %v1234
    %v1239 = vand.u32 2147483647, %v1224
    %vm1240 = vcmp.eq.f32.partialorder %v1239, 8.507059e+37
    %v1241 = vand.u32 %v1224, 2147483648
    %v1242 = vor.u32 1.1754944e-38, %v1241
    %v1243 = vsel %vm1240, %v1242, %v1238
    %v1244 = vmul.f32 1.0, %v1243
    %v1245 = vrcp.pop %v1225
    %v1246 = vmul.f32 %v1225, %v1245
    %v1247 = vsub.f32 1.0, %v1246
    %v1248 = vmul.f32 %v1245, %v1247
    %v1249 = vadd.f32 %v1245, %v1248
    %vm1250 = vweird.f32 %v1225
    %vm1251 = vweird.f32 %v1245
    %vm1252 = vmor %vm1250, %vm1251
    %v1253 = vsel %vm1252, %v1245, %v1249
    %v1254 = vand.u32 2147483647, %v1225
    %vm1255 = vcmp.eq.f32.partialorder %v1254, 8.507059e+37
    %v1256 = vand.u32 %v1225, 2147483648
    %v1257 = vor.u32 1.1754944e-38, %v1256
    %v1258 = vsel %vm1255, %v1257, %v1253
    %v1259 = vmul.f32 1.0, %v1258
    %v1260 = vrcp.pop %v1226
    %v1261 = vmul.f32 %v1226, %v1260
    %v1262 = vsub.f32 1.0, %v1261
    %v1263 = vmul.f32 %v1260, %v1262
    %v1264 = vadd.f32 %v1260, %v1263
    %vm1265 = vweird.f32 %v1226
    %vm1266 = vweird.f32 %v1260
    %vm1267 = vmor %vm1265, %vm1266
    %v1268 = vsel %vm1267, %v1260, %v1264
    %v1269 = vand.u32 2147483647, %v1226
    %vm1270 = vcmp.eq.f32.partialorder %v1269, 8.507059e+37
    %v1271 = vand.u32 %v1226, 2147483648
    %v1272 = vor.u32 1.1754944e-38, %v1271
    %v1273 = vsel %vm1270, %v1272, %v1268
    %v1274 = vmul.f32 1.0, %v1273
    %v1275 = vrcp.pop %v1227
    %v1276 = vmul.f32 %v1227, %v1275
    %v1277 = vsub.f32 1.0, %v1276
    %v1278 = vmul.f32 %v1275, %v1277
    %v1279 = vadd.f32 %v1275, %v1278
    %vm1280 = vweird.f32 %v1227
    %vm1281 = vweird.f32 %v1275
    %vm1282 = vmor %vm1280, %vm1281
    %v1283 = vsel %vm1282, %v1275, %v1279
    %v1284 = vand.u32 2147483647, %v1227
    %vm1285 = vcmp.eq.f32.partialorder %v1284, 8.507059e+37
    %v1286 = vand.u32 %v1227, 2147483648
    %v1287 = vor.u32 1.1754944e-38, %v1286
    %v1288 = vsel %vm1285, %v1287, %v1283
    %v1289 = vmul.f32 1.0, %v1288
    %v1290 = vrcp.pop %v1228
    %v1291 = vmul.f32 %v1228, %v1290
    %v1292 = vsub.f32 1.0, %v1291
    %v1293 = vmul.f32 %v1290, %v1292
    %v1294 = vadd.f32 %v1290, %v1293
    %vm1295 = vweird.f32 %v1228
    %vm1296 = vweird.f32 %v1290
    %vm1297 = vmor %vm1295, %vm1296
    %v1298 = vsel %vm1297, %v1290, %v1294
    %v1299 = vand.u32 2147483647, %v1228
    %vm1300 = vcmp.eq.f32.partialorder %v1299, 8.507059e+37
    %v1301 = vand.u32 %v1228, 2147483648
    %v1302 = vor.u32 1.1754944e-38, %v1301
    %v1303 = vsel %vm1300, %v1302, %v1298
    %v1304 = vmul.f32 1.0, %v1303
    %v1305 = vrcp.pop %v1229
    %v1306 = vmul.f32 %v1229, %v1305
    %v1307 = vsub.f32 1.0, %v1306
    %v1308 = vmul.f32 %v1305, %v1307
    %v1309 = vadd.f32 %v1305, %v1308
    %vm1310 = vweird.f32 %v1229
    %vm1311 = vweird.f32 %v1305
    %vm1312 = vmor %vm1310, %vm1311
    %v1313 = vsel %vm1312, %v1305, %v1309
    %v1314 = vand.u32 2147483647, %v1229
    %vm1315 = vcmp.eq.f32.partialorder %v1314, 8.507059e+37
    %v1316 = vand.u32 %v1229, 2147483648
    %v1317 = vor.u32 1.1754944e-38, %v1316
    %v1318 = vsel %vm1315, %v1317, %v1313
    %v1319 = vmul.f32 1.0, %v1318
    %v1326 = vrot.slane %v1259, 6
    %v1327 = vrot.slane %v1274, 4
    %v1328 = vrot.slane %v1304, 6
    %v1329 = vrot.slane %v1319, 4
    %v1330 = vsel %vm53, %v1244, %v1326
    %v1331 = vsel %vm709, %v1330, %v1327
    %v1332 = vsel %vm53, %v1289, %v1328
    %v1333 = vsel %vm709, %v1332, %v1329
    %vm1334 = vcmask 1044484
    %v1335 = vsel %vm1334, %v1331, %v1331
    %vm1336 = vcmask 1046534
    %v1337 = vsel %vm1336, %v1331, %v1335
    %v1338 = vrot.slane %v1333, 7
    %v1339 = vsel %vm119, %v1338, %v1337
    %v1340 = vsel %vm121, %v1338, %v1339
    %vm1341 = vcmask 1045509
    %v1342 = vsel %vm1341, %v1338, %v1340
    %vm1343 = vcmask 1047559
    %v1344 = vsel %vm1343, %v1338, %v1342
    %1345 = vrot.lane.b32.xlu0 %v1344, 17
    %v1346 = vpop.permute.xlu0 %1345
    %v1347 = vrot.slane %v1346, 2
    %v1348 = vsel %vm100, %v1346, %v1347
    %1350 = vst [vmem:[#allocation4] sm:$0xf] %v1348
    // Predicated region
    $region30: #{tpu_custom_call.1} parent=1 // pred_check
      _
    $region31: #{tpu_custom_call.1} parent=1 // pred_check_branch
      %1352 = sbr.rel (0) target = $region33
    $region32: #{tpu_custom_call.1} parent=1 // pred_region
      %1354 = vsyncadd [#allocation5], 0
      %s1356 = sshll.u32 [#allocation4], 4
      %s1357 = int_to_ptr.vmem [resolvable:$true] %s1356
      %s1358 = sshll.u32 %s7, 4
      %s1359 = int_to_ptr.hbm [resolvable:$true] %s1358
      %1361 = dma.vmem_to_hbm [thread:$0]  %s1357, 64, %s1359, [#allocation5]
    $region33: #{tpu_custom_call.1} parent=1 // pred_fallthru
      _
    // Predicated region
    $region34: #{tpu_custom_call.1} parent=1 // pred_check
      _
    $region35: #{tpu_custom_call.1} parent=1 // pred_check_branch
      %1363 = sbr.rel (0) target = $region37
    $region36: #{tpu_custom_call.1} parent=1 // pred_region
      %1365 = dma.done [#allocation5], 64
    $region37: #{tpu_custom_call.1} parent=1 // pred_fallthru
      _
    %1366 = vsyncpa [#allocation5], 1

</llo_original>
